<compile_context>
chip_gen: v7x
topology: tpu7x:2x2x1
jax: 0.10.0
libtpu: 0.0.40
codegen_flags: <defaults>
</compile_context>

<pallas_src>
import math
import jax
import jax.numpy as jnp
from jax.experimental import pallas as pl
from jax.experimental.pallas import tpu as pltpu


def _make_fusion_kernel(nhead: int):
    def kernel(aux_ref, esti_ref,
               wq_ref, bq_ref, wkv_ref, bkv_ref,
               wot_ref, bo_ref, alpha_ref,
               wfe_ref, wfa_ref, bf_ref,
               out_ref):
        # Channels-on-sublanes / positions-on-lanes layout.
        C = out_ref.shape[1]
        N = out_ref.shape[2]
        hd = C // nhead
        scale = 1.0 / math.sqrt(hd)

        esti_bf = esti_ref[0].astype(jnp.bfloat16)        # (C, N) bf16 MXU operand
        aux_row = aux_ref[0]                              # (1, C) f32

        # --- fused K/V in-projection: one (2C, C) @ (C, N) MXU matmul (bf16 in, f32 acc)
        kv = jnp.dot(wkv_ref[...], esti_bf,
                     preferred_element_type=jnp.float32) + bkv_ref[...]     # (2C, N)
        k = kv[:C, :]                                     # (C, N)
        v = kv[C:, :]                                     # (C, N)

        # --- Q projection for the single (broadcast) query: VPU lane-reduce matvec
        #     q[c] = sum_j Wq[c, j] * aux[j] + bq[c]
        aux_cc = jnp.broadcast_to(aux_row, (C, C))
        q = jnp.sum(wq_ref[...] * aux_cc, axis=1, keepdims=True) + bq_ref[...]   # (C, 1)

        # --- per-head scores for the single query: elementwise q*k then a
        #     segment-sum over each head's hd channels (sublane reduce).
        qk = (q * scale) * k                              # (C, N)
        s = jnp.concatenate(
            [jnp.sum(qk[h * hd:(h + 1) * hd, :], axis=0, keepdims=True)
             for h in range(nhead)], axis=0)              # (nhead, N)
        s = s - jnp.max(s, axis=-1, keepdims=True)
        p = jnp.exp(s)
        p = p * pl.reciprocal(jnp.sum(p, axis=-1, keepdims=True), approx=True)  # (nhead, N)

        # --- attention output for the single query: p-weighted lane-reduce of V.
        p_full = jnp.concatenate(
            [jnp.broadcast_to(p[h:h + 1, :], (hd, N)) for h in range(nhead)],
            axis=0)                                       # (C, N)
        ov = jnp.sum(v * p_full, axis=-1, keepdims=True)  # (C, 1)

        # --- output projection: VPU sublane-reduce matvec with pre-transposed Wo
        #     attn[c] = sum_j Wo[c, j] * ov[j] + bo[c]
        ov_cc = jnp.broadcast_to(ov, (C, C))
        attn = jnp.sum(wot_ref[...] * ov_cc, axis=0, keepdims=True) + bo_ref[...]  # (1, C)

        # --- gated residual (one row; PyTorch broadcasts it to all N positions)
        aux_new = aux_row + alpha_ref[...] * attn         # (1, C)

        # --- 1x1 Conv2d(2C -> C): the aux_new half is constant over (t, f), so it
        #     collapses to a per-batch bias column; only esti needs an MXU matmul.
        aux_new_cc = jnp.broadcast_to(aux_new, (C, C))
        aux_term = (jnp.sum(wfa_ref[...] * aux_new_cc, axis=1, keepdims=True)
                    + bf_ref[...])                        # (C, 1)
        out = jnp.dot(wfe_ref[...], esti_bf,
                      preferred_element_type=jnp.float32) + aux_term        # (C, N)
        out_ref[0] = out.astype(out_ref.dtype)

    return kernel


def stream_fusion_forward(aux, esti, kparams, nhead=4):
    B, C, T, F = esti.shape
    assert C % nhead == 0, "emb_dim must be divisible by nhead"
    N = T * F
    esti_cn = esti.reshape(B, C, N)     # free reshape: native NCHW flatten, lane-dense N
    aux_row = aux.reshape(B, 1, C)

    full = lambda b: (0, 0)
    out = pl.pallas_call(
        _make_fusion_kernel(nhead),
        out_shape=jax.ShapeDtypeStruct((B, C, N), jnp.float32),
        grid_spec=pltpu.PrefetchScalarGridSpec(
            num_scalar_prefetch=0,
            grid=(B,),
            in_specs=[
                pl.BlockSpec((1, 1, C), lambda b: (b, 0, 0)),   # aux   (1, C) row
                pl.BlockSpec((1, C, N), lambda b: (b, 0, 0)),   # esti  (C, N)
                pl.BlockSpec((C, C), full),        # Wq
                pl.BlockSpec((C, 1), full),        # bq    (column)
                pl.BlockSpec((2 * C, C), full),    # [Wk;Wv] fused, bf16
                pl.BlockSpec((2 * C, 1), full),    # [bk;bv] (column)
                pl.BlockSpec((C, C), full),        # Wo^T
                pl.BlockSpec((1, C), full),        # bo    (row)
                pl.BlockSpec((1, C), full),        # alpha (row)
                pl.BlockSpec((C, C), full),        # Wfuse_esti, bf16
                pl.BlockSpec((C, C), full),        # Wfuse_aux
                pl.BlockSpec((C, 1), full),        # bfuse (column)
            ],
            out_specs=pl.BlockSpec((1, C, N), lambda b: (b, 0, 0)),
        ),
        # batch axis is independent -> "parallel" (lets v7x shard it across its 2 TCs)
        compiler_params=pltpu.CompilerParams(dimension_semantics=("parallel",)),
    )(aux_row, esti_cn,
      kparams["wq"], kparams["bq"], kparams["wkv"], kparams["bkv"],
      kparams["wot"], kparams["bo"], kparams["alpha"],
      kparams["wfe"], kparams["wfa"], kparams["bf"])
    return out.reshape(B, C, T, F)      # free reshape back to NCHW


def prepare_params(p):
    """Re-arrange PyTorch-layout parameters into the kernel layout: left-multiply
    weights, fused K/V projection, transposed Wo, column/row biases, and bf16
    storage for the two MXU weight operands (f32 accumulation in the kernel)."""
    col = lambda x: x.reshape(-1, 1).astype(jnp.float32)
    row = lambda x: x.reshape(1, -1).astype(jnp.float32)
    return dict(
        wq=p["wq"].astype(jnp.float32),
        bq=col(p["bq"]),
        wkv=jnp.concatenate([p["wk"], p["wv"]], axis=0).astype(jnp.bfloat16),
        bkv=col(jnp.concatenate([p["bk"], p["bv"]], axis=0)),
        wot=p["wo"].T.astype(jnp.float32),
        bo=row(p["bo"]),
        alpha=row(p["alpha"]),
        wfe=p["wfe"].astype(jnp.bfloat16),
        wfa=p["wfa"].astype(jnp.float32),
        bf=col(p["bf"]),
    )


def reference_forward(aux, esti, params, nhead=4):
    """Pure-JAX f32 reference mirroring the PyTorch forward (eval mode)."""
    B, C, T, F = esti.shape
    N = T * F
    hd = C // nhead
    esti_f = jnp.transpose(esti.reshape(B, C, N), (0, 2, 1))   # (B, N, C)
    aux_b = jnp.broadcast_to(aux[:, None, :], (B, N, C))
    q = aux_b @ params["wq"].T + params["bq"]
    k = esti_f @ params["wk"].T + params["bk"]
    v = esti_f @ params["wv"].T + params["bv"]
    heads = []
    for h in range(nhead):
        sl = slice(h * hd, (h + 1) * hd)
        s = (q[..., sl] * (hd ** -0.5)) @ jnp.swapaxes(k[..., sl], -1, -2)
        p = jax.nn.softmax(s, axis=-1)
        heads.append(p @ v[..., sl])
    attn = jnp.concatenate(heads, axis=-1) @ params["wo"].T + params["bo"]
    aux_new = aux_b + params["alpha"] * attn
    out_f = esti_f @ params["wfe"].T + aux_new @ params["wfa"].T + params["bf"]
    return jnp.transpose(out_f, (0, 2, 1)).reshape(B, C, T, F)


def init_params(key, emb_dim):
    """Parameters in the PyTorch layout (nn.MultiheadAttention / Conv2d(2C,C,1))."""
    C = emb_dim
    ks = jax.random.split(key, 8)
    w = lambda k, shape, s: jax.random.normal(k, shape, jnp.float32) * s
    in_proj_w = w(ks[0], (3 * C, C), 0.1)          # in_proj_weight
    in_proj_b = w(ks[1], (3 * C,), 0.05)           # in_proj_bias
    fusion_w = w(ks[2], (C, 2 * C), 0.1)           # Conv2d weight (1x1 kernel squeezed)
    return dict(
        wq=in_proj_w[0:C], wk=in_proj_w[C:2 * C], wv=in_proj_w[2 * C:3 * C],
        bq=in_proj_b[0:C], bk=in_proj_b[C:2 * C], bv=in_proj_b[2 * C:3 * C],
        wo=w(ks[3], (C, C), 0.1),
        bo=w(ks[4], (C,), 0.05),
        # __init__ zero-inits alpha; use nonzero values so the attention path is exercised.
        alpha=w(ks[5], (C,), 0.5),
        wfe=fusion_w[:, :C], wfa=fusion_w[:, C:],
        bf=w(ks[6], (C,), 0.05),
    )


if __name__ == "__main__":
    B, emb_dim, T, F, nhead = 2, 32, 8, 16, 4
    key = jax.random.PRNGKey(0)
    k_aux, k_esti, k_par = jax.random.split(key, 3)

    aux = jax.random.normal(k_aux, (B, emb_dim), jnp.float32)          # (B, C)
    esti = jax.random.normal(k_esti, (B, emb_dim, T, F), jnp.float32)  # (B, C, T, F) NCHW
    base_params = init_params(k_par, emb_dim)
    kparams = prepare_params(base_params)

    out = stream_fusion_forward(aux, esti, kparams, nhead=nhead)
    out = jax.block_until_ready(out)

    ref = reference_forward(aux, esti, base_params, nhead=nhead)
    assert out.shape == (B, emb_dim, T, F)
    # bf16 MXU operands with f32 accumulation -> compare at bf16-level tolerance.
    assert jnp.allclose(out, ref, rtol=2e-2, atol=2e-2), "mismatch vs pure-JAX reference"

    print("KERNEL_OK")
</pallas_src>

<mosaic_0001>
module attributes {stable_mosaic.version = 11 : i64} {
  func.func @kernel(%arg0: i32, %arg1: memref<1x1x32xf32, #tpu.memory_space<vmem>>, %arg2: memref<1x32x128xf32, #tpu.memory_space<vmem>>, %arg3: memref<32x32xf32, #tpu.memory_space<vmem>>, %arg4: memref<32x1xf32, #tpu.memory_space<vmem>>, %arg5: memref<64x32xbf16, #tpu.memory_space<vmem>>, %arg6: memref<64x1xf32, #tpu.memory_space<vmem>>, %arg7: memref<32x32xf32, #tpu.memory_space<vmem>>, %arg8: memref<1x32xf32, #tpu.memory_space<vmem>>, %arg9: memref<1x32xf32, #tpu.memory_space<vmem>>, %arg10: memref<32x32xbf16, #tpu.memory_space<vmem>>, %arg11: memref<32x32xf32, #tpu.memory_space<vmem>>, %arg12: memref<32x1xf32, #tpu.memory_space<vmem>>, %arg13: memref<1x32x128xf32, #tpu.memory_space<vmem>>) attributes {dimension_semantics = [#tpu.dimension_semantics<parallel>], iteration_bounds = array<i64: 2>, scalar_prefetch = 0 : i64, scratch_operands = 0 : i64, tpu.core_type = #tpu.core_type<tc>, window_params = [{transform_indices = @transform_0, window_bounds = array<i64: 1, 1, 32>}, {transform_indices = @transform_1, window_bounds = array<i64: 1, 32, 128>}, {pipeline_mode = #tpu.pipeline_mode<synchronous>, transform_indices = @transform_2, window_bounds = array<i64: 32, 32>}, {pipeline_mode = #tpu.pipeline_mode<synchronous>, transform_indices = @transform_3, window_bounds = array<i64: 32, 1>}, {pipeline_mode = #tpu.pipeline_mode<synchronous>, transform_indices = @transform_4, window_bounds = array<i64: 64, 32>}, {pipeline_mode = #tpu.pipeline_mode<synchronous>, transform_indices = @transform_5, window_bounds = array<i64: 64, 1>}, {pipeline_mode = #tpu.pipeline_mode<synchronous>, transform_indices = @transform_6, window_bounds = array<i64: 32, 32>}, {pipeline_mode = #tpu.pipeline_mode<synchronous>, transform_indices = @transform_7, window_bounds = array<i64: 1, 32>}, {pipeline_mode = #tpu.pipeline_mode<synchronous>, transform_indices = @transform_8, window_bounds = array<i64: 1, 32>}, {pipeline_mode = #tpu.pipeline_mode<synchronous>, transform_indices = @transform_9, window_bounds = array<i64: 32, 32>}, {pipeline_mode = #tpu.pipeline_mode<synchronous>, transform_indices = @transform_10, window_bounds = array<i64: 32, 32>}, {pipeline_mode = #tpu.pipeline_mode<synchronous>, transform_indices = @transform_11, window_bounds = array<i64: 32, 1>}, {transform_indices = @transform_12, window_bounds = array<i64: 1, 32, 128>}]} {
    %c0 = arith.constant 0 : index
    %c0_0 = arith.constant 0 : index
    %c0_1 = arith.constant 0 : index
    %0 = vector.load %arg2[%c0, %c0_0, %c0_1] : memref<1x32x128xf32, #tpu.memory_space<vmem>>, vector<1x32x128xf32>
    %1 = vector.shape_cast %0 : vector<1x32x128xf32> to vector<32x128xf32>
    %2 = arith.truncf %1 : vector<32x128xf32> to vector<32x128xbf16>
    %c0_2 = arith.constant 0 : index
    %c0_3 = arith.constant 0 : index
    %c0_4 = arith.constant 0 : index
    %3 = vector.load %arg1[%c0_2, %c0_3, %c0_4] : memref<1x1x32xf32, #tpu.memory_space<vmem>>, vector<1x1x32xf32>
    %4 = vector.shape_cast %3 : vector<1x1x32xf32> to vector<1x32xf32>
    %c0_5 = arith.constant 0 : index
    %c0_6 = arith.constant 0 : index
    %5 = vector.load %arg5[%c0_5, %c0_6] : memref<64x32xbf16, #tpu.memory_space<vmem>>, vector<64x32xbf16>
    %cst = arith.constant dense<0.000000e+00> : vector<64x128xf32>
    %6 = tpu.matmul %5, %2, %cst {dimension_numbers = #tpu.dot_dimension_numbers<[1], [0], [0], [1], [0, 0, 1, 1], [], []>} : vector<64x32xbf16>, vector<32x128xbf16>, vector<64x128xf32> -> vector<64x128xf32>
    %c0_7 = arith.constant 0 : index
    %c0_8 = arith.constant 0 : index
    %7 = vector.load %arg6[%c0_7, %c0_8] : memref<64x1xf32, #tpu.memory_space<vmem>>, vector<64x1xf32>
    %8 = vector.broadcast %7 : vector<64x1xf32> to vector<64x128xf32>
    %9 = arith.addf %6, %8 : vector<64x128xf32>
    %10 = vector.extract_strided_slice %9 {offsets = [0, 0], sizes = [32, 128], strides = [1, 1]} : vector<64x128xf32> to vector<32x128xf32>
    %11 = vector.extract_strided_slice %9 {offsets = [32, 0], sizes = [32, 128], strides = [1, 1]} : vector<64x128xf32> to vector<32x128xf32>
    %12 = vector.shape_cast %4 : vector<1x32xf32> to vector<1x32xf32>
    %13 = vector.broadcast %12 : vector<1x32xf32> to vector<32x32xf32>
    %c0_9 = arith.constant 0 : index
    %c0_10 = arith.constant 0 : index
    %14 = vector.load %arg3[%c0_9, %c0_10] : memref<32x32xf32, #tpu.memory_space<vmem>>, vector<32x32xf32>
    %15 = arith.mulf %14, %13 : vector<32x32xf32>
    %cst_11 = arith.constant dense<0.000000e+00> : vector<32xf32>
    %16 = vector.multi_reduction <add>, %15, %cst_11 [1] : vector<32x32xf32> to vector<32xf32>
    %17 = vector.shape_cast %16 : vector<32xf32> to vector<32x1xf32>
    %c0_12 = arith.constant 0 : index
    %c0_13 = arith.constant 0 : index
    %18 = vector.load %arg4[%c0_12, %c0_13] : memref<32x1xf32, #tpu.memory_space<vmem>>, vector<32x1xf32>
    %19 = arith.addf %17, %18 : vector<32x1xf32>
    %cst_14 = arith.constant 0.353553385 : f32
    %20 = vector.broadcast %cst_14 : f32 to vector<32x1xf32>
    %21 = arith.mulf %19, %20 : vector<32x1xf32>
    %22 = vector.broadcast %21 : vector<32x1xf32> to vector<32x128xf32>
    %23 = arith.mulf %22, %10 : vector<32x128xf32>
    %24 = vector.extract_strided_slice %23 {offsets = [0, 0], sizes = [8, 128], strides = [1, 1]} : vector<32x128xf32> to vector<8x128xf32>
    %cst_15 = arith.constant dense<0.000000e+00> : vector<128xf32>
    %25 = vector.multi_reduction <add>, %24, %cst_15 [0] : vector<8x128xf32> to vector<128xf32>
    %26 = vector.shape_cast %25 : vector<128xf32> to vector<1x128xf32>
    %27 = vector.extract_strided_slice %23 {offsets = [8, 0], sizes = [8, 128], strides = [1, 1]} : vector<32x128xf32> to vector<8x128xf32>
    %cst_16 = arith.constant dense<0.000000e+00> : vector<128xf32>
    %28 = vector.multi_reduction <add>, %27, %cst_16 [0] : vector<8x128xf32> to vector<128xf32>
    %29 = vector.shape_cast %28 : vector<128xf32> to vector<1x128xf32>
    %30 = vector.extract_strided_slice %23 {offsets = [16, 0], sizes = [8, 128], strides = [1, 1]} : vector<32x128xf32> to vector<8x128xf32>
    %cst_17 = arith.constant dense<0.000000e+00> : vector<128xf32>
    %31 = vector.multi_reduction <add>, %30, %cst_17 [0] : vector<8x128xf32> to vector<128xf32>
    %32 = vector.shape_cast %31 : vector<128xf32> to vector<1x128xf32>
    %33 = vector.extract_strided_slice %23 {offsets = [24, 0], sizes = [8, 128], strides = [1, 1]} : vector<32x128xf32> to vector<8x128xf32>
    %cst_18 = arith.constant dense<0.000000e+00> : vector<128xf32>
    %34 = vector.multi_reduction <add>, %33, %cst_18 [0] : vector<8x128xf32> to vector<128xf32>
    %35 = vector.shape_cast %34 : vector<128xf32> to vector<1x128xf32>
    %36 = tpu.concatenate %26, %29, %32, %35 in 0 : vector<1x128xf32>, vector<1x128xf32>, vector<1x128xf32>, vector<1x128xf32> -> vector<4x128xf32>
    %cst_19 = arith.constant dense<0xFF800000> : vector<4xf32>
    %37 = vector.multi_reduction <maximumf>, %36, %cst_19 [1] : vector<4x128xf32> to vector<4xf32>
    %38 = vector.shape_cast %37 : vector<4xf32> to vector<4x1xf32>
    %39 = vector.broadcast %38 : vector<4x1xf32> to vector<4x128xf32>
    %40 = arith.subf %36, %39 : vector<4x128xf32>
    %41 = math.exp %40 : vector<4x128xf32>
    %cst_20 = arith.constant dense<0.000000e+00> : vector<4xf32>
    %42 = vector.multi_reduction <add>, %41, %cst_20 [1] : vector<4x128xf32> to vector<4xf32>
    %43 = vector.shape_cast %42 : vector<4xf32> to vector<4x1xf32>
    %44 = tpu.reciprocal %43 {approx = true} : vector<4x1xf32> -> vector<4x1xf32>
    %45 = vector.broadcast %44 : vector<4x1xf32> to vector<4x128xf32>
    %46 = arith.mulf %41, %45 : vector<4x128xf32>
    %47 = vector.extract_strided_slice %46 {offsets = [0, 0], sizes = [1, 128], strides = [1, 1]} : vector<4x128xf32> to vector<1x128xf32>
    %48 = vector.shape_cast %47 : vector<1x128xf32> to vector<1x128xf32>
    %49 = vector.broadcast %48 : vector<1x128xf32> to vector<8x128xf32>
    %50 = vector.extract_strided_slice %46 {offsets = [1, 0], sizes = [1, 128], strides = [1, 1]} : vector<4x128xf32> to vector<1x128xf32>
    %51 = vector.shape_cast %50 : vector<1x128xf32> to vector<1x128xf32>
    %52 = vector.broadcast %51 : vector<1x128xf32> to vector<8x128xf32>
    %53 = vector.extract_strided_slice %46 {offsets = [2, 0], sizes = [1, 128], strides = [1, 1]} : vector<4x128xf32> to vector<1x128xf32>
    %54 = vector.shape_cast %53 : vector<1x128xf32> to vector<1x128xf32>
    %55 = vector.broadcast %54 : vector<1x128xf32> to vector<8x128xf32>
    %56 = vector.extract_strided_slice %46 {offsets = [3, 0], sizes = [1, 128], strides = [1, 1]} : vector<4x128xf32> to vector<1x128xf32>
    %57 = vector.shape_cast %56 : vector<1x128xf32> to vector<1x128xf32>
    %58 = vector.broadcast %57 : vector<1x128xf32> to vector<8x128xf32>
    %59 = tpu.concatenate %49, %52, %55, %58 in 0 : vector<8x128xf32>, vector<8x128xf32>, vector<8x128xf32>, vector<8x128xf32> -> vector<32x128xf32>
    %60 = arith.mulf %11, %59 : vector<32x128xf32>
    %cst_21 = arith.constant dense<0.000000e+00> : vector<32xf32>
    %61 = vector.multi_reduction <add>, %60, %cst_21 [1] : vector<32x128xf32> to vector<32xf32>
    %62 = vector.shape_cast %61 : vector<32xf32> to vector<32x1xf32>
    %63 = vector.shape_cast %62 : vector<32x1xf32> to vector<32x1xf32>
    %64 = vector.broadcast %63 : vector<32x1xf32> to vector<32x32xf32>
    %c0_22 = arith.constant 0 : index
    %c0_23 = arith.constant 0 : index
    %65 = vector.load %arg7[%c0_22, %c0_23] : memref<32x32xf32, #tpu.memory_space<vmem>>, vector<32x32xf32>
    %66 = arith.mulf %65, %64 : vector<32x32xf32>
    %cst_24 = arith.constant dense<0.000000e+00> : vector<32xf32>
    %67 = vector.multi_reduction <add>, %66, %cst_24 [0] : vector<32x32xf32> to vector<32xf32>
    %68 = vector.shape_cast %67 : vector<32xf32> to vector<1x32xf32>
    %c0_25 = arith.constant 0 : index
    %c0_26 = arith.constant 0 : index
    %69 = vector.load %arg8[%c0_25, %c0_26] : memref<1x32xf32, #tpu.memory_space<vmem>>, vector<1x32xf32>
    %70 = arith.addf %68, %69 : vector<1x32xf32>
    %c0_27 = arith.constant 0 : index
    %c0_28 = arith.constant 0 : index
    %71 = vector.load %arg9[%c0_27, %c0_28] : memref<1x32xf32, #tpu.memory_space<vmem>>, vector<1x32xf32>
    %72 = arith.mulf %71, %70 : vector<1x32xf32>
    %73 = arith.addf %4, %72 : vector<1x32xf32>
    %74 = vector.shape_cast %73 : vector<1x32xf32> to vector<1x32xf32>
    %75 = vector.broadcast %74 : vector<1x32xf32> to vector<32x32xf32>
    %c0_29 = arith.constant 0 : index
    %c0_30 = arith.constant 0 : index
    %76 = vector.load %arg11[%c0_29, %c0_30] : memref<32x32xf32, #tpu.memory_space<vmem>>, vector<32x32xf32>
    %77 = arith.mulf %76, %75 : vector<32x32xf32>
    %cst_31 = arith.constant dense<0.000000e+00> : vector<32xf32>
    %78 = vector.multi_reduction <add>, %77, %cst_31 [1] : vector<32x32xf32> to vector<32xf32>
    %79 = vector.shape_cast %78 : vector<32xf32> to vector<32x1xf32>
    %c0_32 = arith.constant 0 : index
    %c0_33 = arith.constant 0 : index
    %80 = vector.load %arg12[%c0_32, %c0_33] : memref<32x1xf32, #tpu.memory_space<vmem>>, vector<32x1xf32>
    %81 = arith.addf %79, %80 : vector<32x1xf32>
    %c0_34 = arith.constant 0 : index
    %c0_35 = arith.constant 0 : index
    %82 = vector.load %arg10[%c0_34, %c0_35] : memref<32x32xbf16, #tpu.memory_space<vmem>>, vector<32x32xbf16>
    %cst_36 = arith.constant dense<0.000000e+00> : vector<32x128xf32>
    %83 = tpu.matmul %82, %2, %cst_36 {dimension_numbers = #tpu.dot_dimension_numbers<[1], [0], [0], [1], [0, 0, 1, 1], [], []>} : vector<32x32xbf16>, vector<32x128xbf16>, vector<32x128xf32> -> vector<32x128xf32>
    %84 = vector.broadcast %81 : vector<32x1xf32> to vector<32x128xf32>
    %85 = arith.addf %83, %84 : vector<32x128xf32>
    %c0_37 = arith.constant 0 : index
    %c0_38 = arith.constant 0 : index
    %c0_39 = arith.constant 0 : index
    %86 = vector.load %arg13[%c0_37, %c0_38, %c0_39] : memref<1x32x128xf32, #tpu.memory_space<vmem>>, vector<1x32x128xf32>
    %87 = vector.shape_cast %86 : vector<1x32x128xf32> to vector<32x128xf32>
    %88 = vector.shape_cast %85 : vector<32x128xf32> to vector<1x32x128xf32>
    tpu.vector_store %arg13[%c0_37, %c0_38, %c0_39], %88 {strides = array<i32>} : memref<1x32x128xf32, #tpu.memory_space<vmem>>, vector<1x32x128xf32>,
    return
  }
  func.func @transform_0(%arg0: i32) -> (i32, i32, i32) {
    %c0_i32 = arith.constant 0 : i32
    %c0_i32_0 = arith.constant 0 : i32
    %c0_i32_1 = arith.constant 0 : i32
    return %arg0, %c0_i32, %c0_i32_0 : i32, i32, i32
  }
  func.func @transform_1(%arg0: i32) -> (i32, i32, i32) {
    %c0_i32 = arith.constant 0 : i32
    %c0_i32_0 = arith.constant 0 : i32
    %c0_i32_1 = arith.constant 0 : i32
    return %arg0, %c0_i32, %c0_i32_0 : i32, i32, i32
  }
  func.func @transform_2(%arg0: i32) -> (i32, i32) {
    %c0_i32 = arith.constant 0 : i32
    %c0_i32_0 = arith.constant 0 : i32
    %c0_i32_1 = arith.constant 0 : i32
    return %c0_i32, %c0_i32_0 : i32, i32
  }
  func.func @transform_3(%arg0: i32) -> (i32, i32) {
    %c0_i32 = arith.constant 0 : i32
    %c0_i32_0 = arith.constant 0 : i32
    %c0_i32_1 = arith.constant 0 : i32
    return %c0_i32, %c0_i32_0 : i32, i32
  }
  func.func @transform_4(%arg0: i32) -> (i32, i32) {
    %c0_i32 = arith.constant 0 : i32
    %c0_i32_0 = arith.constant 0 : i32
    %c0_i32_1 = arith.constant 0 : i32
    return %c0_i32, %c0_i32_0 : i32, i32
  }
  func.func @transform_5(%arg0: i32) -> (i32, i32) {
    %c0_i32 = arith.constant 0 : i32
    %c0_i32_0 = arith.constant 0 : i32
    %c0_i32_1 = arith.constant 0 : i32
    return %c0_i32, %c0_i32_0 : i32, i32
  }
  func.func @transform_6(%arg0: i32) -> (i32, i32) {
    %c0_i32 = arith.constant 0 : i32
    %c0_i32_0 = arith.constant 0 : i32
    %c0_i32_1 = arith.constant 0 : i32
    return %c0_i32, %c0_i32_0 : i32, i32
  }
  func.func @transform_7(%arg0: i32) -> (i32, i32) {
    %c0_i32 = arith.constant 0 : i32
    %c0_i32_0 = arith.constant 0 : i32
    %c0_i32_1 = arith.constant 0 : i32
    return %c0_i32, %c0_i32_0 : i32, i32
  }
  func.func @transform_8(%arg0: i32) -> (i32, i32) {
    %c0_i32 = arith.constant 0 : i32
    %c0_i32_0 = arith.constant 0 : i32
    %c0_i32_1 = arith.constant 0 : i32
    return %c0_i32, %c0_i32_0 : i32, i32
  }
  func.func @transform_9(%arg0: i32) -> (i32, i32) {
    %c0_i32 = arith.constant 0 : i32
    %c0_i32_0 = arith.constant 0 : i32
    %c0_i32_1 = arith.constant 0 : i32
    return %c0_i32, %c0_i32_0 : i32, i32
  }
  func.func @transform_10(%arg0: i32) -> (i32, i32) {
    %c0_i32 = arith.constant 0 : i32
    %c0_i32_0 = arith.constant 0 : i32
    %c0_i32_1 = arith.constant 0 : i32
    return %c0_i32, %c0_i32_0 : i32, i32
  }
  func.func @transform_11(%arg0: i32) -> (i32, i32) {
    %c0_i32 = arith.constant 0 : i32
    %c0_i32_0 = arith.constant 0 : i32
    %c0_i32_1 = arith.constant 0 : i32
    return %c0_i32, %c0_i32_0 : i32, i32
  }
  func.func @transform_12(%arg0: i32) -> (i32, i32, i32) {
    %c0_i32 = arith.constant 0 : i32
    %c0_i32_0 = arith.constant 0 : i32
    %c0_i32_1 = arith.constant 0 : i32
    return %arg0, %c0_i32, %c0_i32_0 : i32, i32, i32
  }
}

</mosaic_0001>

<llo_original>
// kernel: tpu_custom_call.1
$region0: #{tpu_custom_call.1}
  #allocation0 [shape = 'u32[]', space=smem, size = 0x4, offset = 0x4, fixed_abs, tag = 'smem constant byte address 0x4 - core index']
  #allocation1 [shape = 'u32[144,128]{1,0:T(1,128)}', space=vmem, size = 0x12000, scoped, tag = 'internal scratch']
  %s0 = inlined_call_operand.vmem [shape: f32[2,1,32], index: 0, kind: input, shape index: {}]
  %s1 = inlined_call_operand.vmem [shape: f32[2,32,128], index: 1, kind: input, shape index: {}]
  %s2 = inlined_call_operand.vmem [shape: f32[32,32], index: 2, kind: input, shape index: {}]
  %s3 = inlined_call_operand.vmem [shape: f32[32,1], index: 3, kind: input, shape index: {}]
  %s4 = inlined_call_operand.vmem [shape: bf16[64,32], index: 4, kind: input, shape index: {}]
  %s5 = inlined_call_operand.vmem [shape: f32[64,1], index: 5, kind: input, shape index: {}]
  %s6 = inlined_call_operand.vmem [shape: f32[32,32], index: 6, kind: input, shape index: {}]
  %s7 = inlined_call_operand.vmem [shape: f32[1,32], index: 7, kind: input, shape index: {}]
  %s8 = inlined_call_operand.vmem [shape: f32[1,32], index: 8, kind: input, shape index: {}]
  %s9 = inlined_call_operand.vmem [shape: bf16[32,32], index: 9, kind: input, shape index: {}]
  %s10 = inlined_call_operand.vmem [shape: f32[32,32], index: 10, kind: input, shape index: {}]
  %s11 = inlined_call_operand.vmem [shape: f32[32,1], index: 11, kind: input, shape index: {}]
  %s12 = inlined_call_operand.hbm [shape: f32[2,32,128], index: 12, kind: output, shape index: {}]
  %s13 = sld [smem:[#allocation0]]
  $region81: #{tpu_custom_call.1} parent=0
    _
  %s15 = ssub.s32 1, %s13
  %s16 = scalar_select 0, %s15, %s13
  $region1: #{tpu_custom_call.1} parent=0
    #allocation2 [shape = 'u8[32768]{0}', space=vmem, size = 0x8000, scoped, tag = 'output window, operand 0']
    #allocation3 [shape = 's32[2]{0}', space=sflag, size = 0x8, scoped, tag = 'scoped memory for tpu_custom_call.1']
    %17 = vsyncpa [#allocation3], 0
    %s18 = scalar_lea.sflag [#allocation3], 1
    %19 = vsyncpa %s18, 0
    loop: start=0, step=1, limit=4
    $region2: #{tpu_custom_call.1} parent=1 // loop_pre_header
      _
    $region3: #{tpu_custom_call.1} parent=1 // loop_header
      %s21 = sphi 0, %s25
      %p22 = scmp.ge.s32.totalorder %s21, 4
      %s31 = sphi 0, %s33
      %s34 = sphi 0, %s31
      %s35 = sphi 0, %s34
      %s51 = sphi 0, %s35
      %s57 = sphi 0, %s59
      %s60 = sphi 0, %s57
      %s61 = sphi 0, %s60
      %s77 = sphi 0, %s61
      %s81 = sphi 0, %s81
      %s83 = sphi 0, %s81
      %s84 = sphi 0, %s83
      %s98 = sphi 0, %s84
      %s102 = sphi 0, %s102
      %s104 = sphi 0, %s102
      %s105 = sphi 0, %s104
      %s119 = sphi 0, %s105
      %s123 = sphi 0, %s123
      %s125 = sphi 0, %s123
      %s126 = sphi 0, %s125
      %s140 = sphi 0, %s126
      %s144 = sphi 0, %s144
      %s146 = sphi 0, %s144
      %s147 = sphi 0, %s146
      %s161 = sphi 0, %s147
      %s165 = sphi 0, %s165
      %s167 = sphi 0, %s165
      %s168 = sphi 0, %s167
      %s182 = sphi 0, %s168
      %s186 = sphi 0, %s186
      %s188 = sphi 0, %s186
      %s189 = sphi 0, %s188
      %s203 = sphi 0, %s189
      %s207 = sphi 0, %s207
      %s209 = sphi 0, %s207
      %s210 = sphi 0, %s209
      %s224 = sphi 0, %s210
      %s228 = sphi 0, %s228
      %s230 = sphi 0, %s228
      %s231 = sphi 0, %s230
      %s245 = sphi 0, %s231
      %s249 = sphi 0, %s249
      %s251 = sphi 0, %s249
      %s252 = sphi 0, %s251
      %s266 = sphi 0, %s252
      %s270 = sphi 0, %s270
      %s272 = sphi 0, %s270
      %s273 = sphi 0, %s272
      %s287 = sphi 0, %s273
      %s293 = sphi 0, %s295
      %s296 = sphi 0, %s293
      %s297 = sphi 0, %s296
      %s313 = sphi 0, %s297
    $region4: #{tpu_custom_call.1} parent=1 // loop_header_branch
      %24 = sbr.rel (%p22) target = $region8
    $region5: #{tpu_custom_call.1} parent=1 // loop_body
      %s26 = ssub.s32 %s21, 1
      %s27 = ssub.s32 %s21, 2
      %s28 = sadd.s32 %s21, 1
      %s29 = ssub.s32 %s21, %s28
      %p30 = scmp.eq.s32.totalorder %s29, 0
      %s32 = sadd.s32 %s31, 1
      %s33 = scalar_select %p30, %s31, %s32
      %p36 = pneg %p30
      %p37 = scmp.eq.s32.totalorder %s21, 1
      %p38 = por %p36, %p37
      %p39 = scmp.ne.s32.totalorder %s31, %s34
      %p40 = scmp.eq.s32.totalorder %s21, 0
      %p41 = por %p39, %p40
      %p42 = scmp.ne.s32.totalorder %s31, %s34
      %p43 = scmp.eq.s32.totalorder %s26, 1
      %p44 = por %p42, %p43
      %p45 = scmp.ne.s32.totalorder %s34, %s35
      %p46 = scmp.eq.s32.totalorder %s26, 0
      %p47 = por %p45, %p46
      %p48 = scmp.ne.s32.totalorder %s34, %s35
      %p49 = scmp.eq.s32.totalorder %s27, 1
      %p50 = por %p48, %p49
      %p52 = scmp.ne.s32.totalorder %s35, %s51
      %p53 = scmp.eq.s32.totalorder %s27, 0
      %p54 = por %p52, %p53
      %s55 = ssub.s32 %s21, %s28
      %p56 = scmp.eq.s32.totalorder %s55, 0
      %s58 = sadd.s32 %s57, 1
      %s59 = scalar_select %p56, %s57, %s58
      %p62 = pneg %p56
      %p63 = scmp.eq.s32.totalorder %s21, 1
      %p64 = por %p62, %p63
      %p65 = scmp.ne.s32.totalorder %s57, %s60
      %p66 = scmp.eq.s32.totalorder %s21, 0
      %p67 = por %p65, %p66
      %p68 = scmp.ne.s32.totalorder %s57, %s60
      %p69 = scmp.eq.s32.totalorder %s26, 1
      %p70 = por %p68, %p69
      %p71 = scmp.ne.s32.totalorder %s60, %s61
      %p72 = scmp.eq.s32.totalorder %s26, 0
      %p73 = por %p71, %p72
      %p74 = scmp.ne.s32.totalorder %s60, %s61
      %p75 = scmp.eq.s32.totalorder %s27, 1
      %p76 = por %p74, %p75
      %p78 = scmp.ne.s32.totalorder %s61, %s77
      %p79 = scmp.eq.s32.totalorder %s27, 0
      %p80 = por %p78, %p79
      %s82 = sadd.s32 %s81, 1
      %p85 = scmp.eq.s32.totalorder %s21, 1
      %p86 = scmp.ne.s32.totalorder %s81, %s83
      %p87 = scmp.eq.s32.totalorder %s21, 0
      %p88 = por %p86, %p87
      %p89 = scmp.ne.s32.totalorder %s81, %s83
      %p90 = scmp.eq.s32.totalorder %s26, 1
      %p91 = por %p89, %p90
      %p92 = scmp.ne.s32.totalorder %s83, %s84
      %p93 = scmp.eq.s32.totalorder %s26, 0
      %p94 = por %p92, %p93
      %p95 = scmp.ne.s32.totalorder %s83, %s84
      %p96 = scmp.eq.s32.totalorder %s27, 1
      %p97 = por %p95, %p96
      %p99 = scmp.ne.s32.totalorder %s84, %s98
      %p100 = scmp.eq.s32.totalorder %s27, 0
      %p101 = por %p99, %p100
      %s103 = sadd.s32 %s102, 1
      %p106 = scmp.eq.s32.totalorder %s21, 1
      %p107 = scmp.ne.s32.totalorder %s102, %s104
      %p108 = scmp.eq.s32.totalorder %s21, 0
      %p109 = por %p107, %p108
      %p110 = scmp.ne.s32.totalorder %s102, %s104
      %p111 = scmp.eq.s32.totalorder %s26, 1
      %p112 = por %p110, %p111
      %p113 = scmp.ne.s32.totalorder %s104, %s105
      %p114 = scmp.eq.s32.totalorder %s26, 0
      %p115 = por %p113, %p114
      %p116 = scmp.ne.s32.totalorder %s104, %s105
      %p117 = scmp.eq.s32.totalorder %s27, 1
      %p118 = por %p116, %p117
      %p120 = scmp.ne.s32.totalorder %s105, %s119
      %p121 = scmp.eq.s32.totalorder %s27, 0
      %p122 = por %p120, %p121
      %s124 = sadd.s32 %s123, 1
      %p127 = scmp.eq.s32.totalorder %s21, 1
      %p128 = scmp.ne.s32.totalorder %s123, %s125
      %p129 = scmp.eq.s32.totalorder %s21, 0
      %p130 = por %p128, %p129
      %p131 = scmp.ne.s32.totalorder %s123, %s125
      %p132 = scmp.eq.s32.totalorder %s26, 1
      %p133 = por %p131, %p132
      %p134 = scmp.ne.s32.totalorder %s125, %s126
      %p135 = scmp.eq.s32.totalorder %s26, 0
      %p136 = por %p134, %p135
      %p137 = scmp.ne.s32.totalorder %s125, %s126
      %p138 = scmp.eq.s32.totalorder %s27, 1
      %p139 = por %p137, %p138
      %p141 = scmp.ne.s32.totalorder %s126, %s140
      %p142 = scmp.eq.s32.totalorder %s27, 0
      %p143 = por %p141, %p142
      %s145 = sadd.s32 %s144, 1
      %p148 = scmp.eq.s32.totalorder %s21, 1
      %p149 = scmp.ne.s32.totalorder %s144, %s146
      %p150 = scmp.eq.s32.totalorder %s21, 0
      %p151 = por %p149, %p150
      %p152 = scmp.ne.s32.totalorder %s144, %s146
      %p153 = scmp.eq.s32.totalorder %s26, 1
      %p154 = por %p152, %p153
      %p155 = scmp.ne.s32.totalorder %s146, %s147
      %p156 = scmp.eq.s32.totalorder %s26, 0
      %p157 = por %p155, %p156
      %p158 = scmp.ne.s32.totalorder %s146, %s147
      %p159 = scmp.eq.s32.totalorder %s27, 1
      %p160 = por %p158, %p159
      %p162 = scmp.ne.s32.totalorder %s147, %s161
      %p163 = scmp.eq.s32.totalorder %s27, 0
      %p164 = por %p162, %p163
      %s166 = sadd.s32 %s165, 1
      %p169 = scmp.eq.s32.totalorder %s21, 1
      %p170 = scmp.ne.s32.totalorder %s165, %s167
      %p171 = scmp.eq.s32.totalorder %s21, 0
      %p172 = por %p170, %p171
      %p173 = scmp.ne.s32.totalorder %s165, %s167
      %p174 = scmp.eq.s32.totalorder %s26, 1
      %p175 = por %p173, %p174
      %p176 = scmp.ne.s32.totalorder %s167, %s168
      %p177 = scmp.eq.s32.totalorder %s26, 0
      %p178 = por %p176, %p177
      %p179 = scmp.ne.s32.totalorder %s167, %s168
      %p180 = scmp.eq.s32.totalorder %s27, 1
      %p181 = por %p179, %p180
      %p183 = scmp.ne.s32.totalorder %s168, %s182
      %p184 = scmp.eq.s32.totalorder %s27, 0
      %p185 = por %p183, %p184
      %s187 = sadd.s32 %s186, 1
      %p190 = scmp.eq.s32.totalorder %s21, 1
      %p191 = scmp.ne.s32.totalorder %s186, %s188
      %p192 = scmp.eq.s32.totalorder %s21, 0
      %p193 = por %p191, %p192
      %p194 = scmp.ne.s32.totalorder %s186, %s188
      %p195 = scmp.eq.s32.totalorder %s26, 1
      %p196 = por %p194, %p195
      %p197 = scmp.ne.s32.totalorder %s188, %s189
      %p198 = scmp.eq.s32.totalorder %s26, 0
      %p199 = por %p197, %p198
      %p200 = scmp.ne.s32.totalorder %s188, %s189
      %p201 = scmp.eq.s32.totalorder %s27, 1
      %p202 = por %p200, %p201
      %p204 = scmp.ne.s32.totalorder %s189, %s203
      %p205 = scmp.eq.s32.totalorder %s27, 0
      %p206 = por %p204, %p205
      %s208 = sadd.s32 %s207, 1
      %p211 = scmp.eq.s32.totalorder %s21, 1
      %p212 = scmp.ne.s32.totalorder %s207, %s209
      %p213 = scmp.eq.s32.totalorder %s21, 0
      %p214 = por %p212, %p213
      %p215 = scmp.ne.s32.totalorder %s207, %s209
      %p216 = scmp.eq.s32.totalorder %s26, 1
      %p217 = por %p215, %p216
      %p218 = scmp.ne.s32.totalorder %s209, %s210
      %p219 = scmp.eq.s32.totalorder %s26, 0
      %p220 = por %p218, %p219
      %p221 = scmp.ne.s32.totalorder %s209, %s210
      %p222 = scmp.eq.s32.totalorder %s27, 1
      %p223 = por %p221, %p222
      %p225 = scmp.ne.s32.totalorder %s210, %s224
      %p226 = scmp.eq.s32.totalorder %s27, 0
      %p227 = por %p225, %p226
      %s229 = sadd.s32 %s228, 1
      %p232 = scmp.eq.s32.totalorder %s21, 1
      %p233 = scmp.ne.s32.totalorder %s228, %s230
      %p234 = scmp.eq.s32.totalorder %s21, 0
      %p235 = por %p233, %p234
      %p236 = scmp.ne.s32.totalorder %s228, %s230
      %p237 = scmp.eq.s32.totalorder %s26, 1
      %p238 = por %p236, %p237
      %p239 = scmp.ne.s32.totalorder %s230, %s231
      %p240 = scmp.eq.s32.totalorder %s26, 0
      %p241 = por %p239, %p240
      %p242 = scmp.ne.s32.totalorder %s230, %s231
      %p243 = scmp.eq.s32.totalorder %s27, 1
      %p244 = por %p242, %p243
      %p246 = scmp.ne.s32.totalorder %s231, %s245
      %p247 = scmp.eq.s32.totalorder %s27, 0
      %p248 = por %p246, %p247
      %s250 = sadd.s32 %s249, 1
      %p253 = scmp.eq.s32.totalorder %s21, 1
      %p254 = scmp.ne.s32.totalorder %s249, %s251
      %p255 = scmp.eq.s32.totalorder %s21, 0
      %p256 = por %p254, %p255
      %p257 = scmp.ne.s32.totalorder %s249, %s251
      %p258 = scmp.eq.s32.totalorder %s26, 1
      %p259 = por %p257, %p258
      %p260 = scmp.ne.s32.totalorder %s251, %s252
      %p261 = scmp.eq.s32.totalorder %s26, 0
      %p262 = por %p260, %p261
      %p263 = scmp.ne.s32.totalorder %s251, %s252
      %p264 = scmp.eq.s32.totalorder %s27, 1
      %p265 = por %p263, %p264
      %p267 = scmp.ne.s32.totalorder %s252, %s266
      %p268 = scmp.eq.s32.totalorder %s27, 0
      %p269 = por %p267, %p268
      %s271 = sadd.s32 %s270, 1
      %p274 = scmp.eq.s32.totalorder %s21, 1
      %p275 = scmp.ne.s32.totalorder %s270, %s272
      %p276 = scmp.eq.s32.totalorder %s21, 0
      %p277 = por %p275, %p276
      %p278 = scmp.ne.s32.totalorder %s270, %s272
      %p279 = scmp.eq.s32.totalorder %s26, 1
      %p280 = por %p278, %p279
      %p281 = scmp.ne.s32.totalorder %s272, %s273
      %p282 = scmp.eq.s32.totalorder %s26, 0
      %p283 = por %p281, %p282
      %p284 = scmp.ne.s32.totalorder %s272, %s273
      %p285 = scmp.eq.s32.totalorder %s27, 1
      %p286 = por %p284, %p285
      %p288 = scmp.ne.s32.totalorder %s273, %s287
      %p289 = scmp.eq.s32.totalorder %s27, 0
      %p290 = por %p288, %p289
      %s291 = ssub.s32 %s21, %s28
      %p292 = scmp.eq.s32.totalorder %s291, 0
      %s294 = sadd.s32 %s293, 1
      %s295 = scalar_select %p292, %s293, %s294
      %p298 = pneg %p292
      %p299 = scmp.eq.s32.totalorder %s21, 1
      %p300 = por %p298, %p299
      %p301 = scmp.ne.s32.totalorder %s293, %s296
      %p302 = scmp.eq.s32.totalorder %s21, 0
      %p303 = por %p301, %p302
      %p304 = scmp.ne.s32.totalorder %s293, %s296
      %p305 = scmp.eq.s32.totalorder %s26, 1
      %p306 = por %p304, %p305
      %p307 = scmp.ne.s32.totalorder %s296, %s297
      %p308 = scmp.eq.s32.totalorder %s26, 0
      %p309 = por %p307, %p308
      %p310 = scmp.ne.s32.totalorder %s296, %s297
      %p311 = scmp.eq.s32.totalorder %s27, 1
      %p312 = por %p310, %p311
      %p314 = scmp.ne.s32.totalorder %s297, %s313
      %p315 = scmp.eq.s32.totalorder %s27, 0
      %p316 = por %p314, %p315
      %p317 = scmp.le.s32.totalorder 1, %s21
      %p318 = scmp.lt.s32.totalorder %s21, 3
      %p319 = pnand %p317, %p318
      %p320 = pneg %p319
      // Predicated region
      $region9: #{tpu_custom_call.1} parent=5 // pred_check
        _
      $region10: #{tpu_custom_call.1} parent=5 // pred_check_branch
        %322 = sbr.rel (%p319) target = $region12
      $region11: #{tpu_custom_call.1} parent=5 // pred_region
        %s323 = ssub.s32 %s21, 1
        // Predicated region
        $region13: #{tpu_custom_call.1} parent=11 // pred_check
          %p324 = pneg %p94
        $region14: #{tpu_custom_call.1} parent=11 // pred_check_branch
          %326 = sbr.rel (%p324) target = $region16
        $region15: #{tpu_custom_call.1} parent=11 // pred_region
          _
        $region16: #{tpu_custom_call.1} parent=11 // pred_fallthru
          _
        // Predicated region
        $region17: #{tpu_custom_call.1} parent=11 // pred_check
          %p327 = pneg %p115
        $region18: #{tpu_custom_call.1} parent=11 // pred_check_branch
          %329 = sbr.rel (%p327) target = $region20
        $region19: #{tpu_custom_call.1} parent=11 // pred_region
          _
        $region20: #{tpu_custom_call.1} parent=11 // pred_fallthru
          _
        // Predicated region
        $region21: #{tpu_custom_call.1} parent=11 // pred_check
          %p330 = pneg %p136
        $region22: #{tpu_custom_call.1} parent=11 // pred_check_branch
          %332 = sbr.rel (%p330) target = $region24
        $region23: #{tpu_custom_call.1} parent=11 // pred_region
          _
        $region24: #{tpu_custom_call.1} parent=11 // pred_fallthru
          _
        // Predicated region
        $region25: #{tpu_custom_call.1} parent=11 // pred_check
          %p333 = pneg %p157
        $region26: #{tpu_custom_call.1} parent=11 // pred_check_branch
          %335 = sbr.rel (%p333) target = $region28
        $region27: #{tpu_custom_call.1} parent=11 // pred_region
          _
        $region28: #{tpu_custom_call.1} parent=11 // pred_fallthru
          _
        // Predicated region
        $region29: #{tpu_custom_call.1} parent=11 // pred_check
          %p336 = pneg %p178
        $region30: #{tpu_custom_call.1} parent=11 // pred_check_branch
          %338 = sbr.rel (%p336) target = $region32
        $region31: #{tpu_custom_call.1} parent=11 // pred_region
          _
        $region32: #{tpu_custom_call.1} parent=11 // pred_fallthru
          _
        // Predicated region
        $region33: #{tpu_custom_call.1} parent=11 // pred_check
          %p339 = pneg %p199
        $region34: #{tpu_custom_call.1} parent=11 // pred_check_branch
          %341 = sbr.rel (%p339) target = $region36
        $region35: #{tpu_custom_call.1} parent=11 // pred_region
          _
        $region36: #{tpu_custom_call.1} parent=11 // pred_fallthru
          _
        // Predicated region
        $region37: #{tpu_custom_call.1} parent=11 // pred_check
          %p342 = pneg %p220
        $region38: #{tpu_custom_call.1} parent=11 // pred_check_branch
          %344 = sbr.rel (%p342) target = $region40
        $region39: #{tpu_custom_call.1} parent=11 // pred_region
          _
        $region40: #{tpu_custom_call.1} parent=11 // pred_fallthru
          _
        // Predicated region
        $region41: #{tpu_custom_call.1} parent=11 // pred_check
          %p345 = pneg %p241
        $region42: #{tpu_custom_call.1} parent=11 // pred_check_branch
          %347 = sbr.rel (%p345) target = $region44
        $region43: #{tpu_custom_call.1} parent=11 // pred_region
          _
        $region44: #{tpu_custom_call.1} parent=11 // pred_fallthru
          _
        // Predicated region
        $region45: #{tpu_custom_call.1} parent=11 // pred_check
          %p348 = pneg %p262
        $region46: #{tpu_custom_call.1} parent=11 // pred_check_branch
          %350 = sbr.rel (%p348) target = $region48
        $region47: #{tpu_custom_call.1} parent=11 // pred_region
          _
        $region48: #{tpu_custom_call.1} parent=11 // pred_fallthru
          _
        // Predicated region
        $region49: #{tpu_custom_call.1} parent=11 // pred_check
          %p351 = pneg %p283
        $region50: #{tpu_custom_call.1} parent=11 // pred_check_branch
          %353 = sbr.rel (%p351) target = $region52
        $region51: #{tpu_custom_call.1} parent=11 // pred_region
          _
        $region52: #{tpu_custom_call.1} parent=11 // pred_fallthru
          _
      $region12: #{tpu_custom_call.1} parent=5 // pred_fallthru
        _
      %p354 = scmp.lt.s32.totalorder %s21, 2
      // Predicated region
      $region53: #{tpu_custom_call.1} parent=5 // pred_check
        %p355 = pneg %p354
      $region54: #{tpu_custom_call.1} parent=5 // pred_check_branch
        %357 = sbr.rel (%p355) target = $region56
      $region55: #{tpu_custom_call.1} parent=5 // pred_region
        // Predicated region
        $region57: #{tpu_custom_call.1} parent=55 // pred_check
          %p358 = pneg %p41
        $region58: #{tpu_custom_call.1} parent=55 // pred_check_branch
          %360 = sbr.rel (%p358) target = $region60
        $region59: #{tpu_custom_call.1} parent=55 // pred_region
          %p361 = scmp.lt.s32.totalorder %s21, 1
          %s362 = scalar_select %p361, %s21, 1
          %s363 = scalar_lea.vmem %s0, %s362
        $region60: #{tpu_custom_call.1} parent=55 // pred_fallthru
          _
        // Predicated region
        $region61: #{tpu_custom_call.1} parent=55 // pred_check
          %p364 = pneg %p67
        $region62: #{tpu_custom_call.1} parent=55 // pred_check_branch
          %366 = sbr.rel (%p364) target = $region64
        $region63: #{tpu_custom_call.1} parent=55 // pred_region
          %p367 = scmp.lt.s32.totalorder %s21, 1
          %s368 = scalar_select %p367, %s21, 1
          %s369 = smul.addr %s368, 4
          %s370 = smul.addr %s369, 8
          %s371 = scalar_lea.vmem %s1, %s370
        $region64: #{tpu_custom_call.1} parent=55 // pred_fallthru
          _
      $region56: #{tpu_custom_call.1} parent=5 // pred_fallthru
        _
      %p372 = scmp.le.s32.totalorder 1, %s21
      %p373 = scmp.lt.s32.totalorder %s21, 3
      %p374 = pnand %p372, %p373
      %p375 = pneg %p374
      // Predicated region
      $region65: #{tpu_custom_call.1} parent=5 // pred_check
        _
      $region66: #{tpu_custom_call.1} parent=5 // pred_check_branch
        %377 = sbr.rel (%p374) target = $region68
      $region67: #{tpu_custom_call.1} parent=5 // pred_region
        %s378 = ssub.s32 %s21, 1
        %p379 = scmp.lt.s32.totalorder %s26, 1
        %s380 = scalar_select %p379, %s26, 1
        %s381 = scalar_lea.vmem %s0, %s380
        %p382 = pneg %p47
        %p383 = pneg %p44
        %p384 = scmp.lt.s32.totalorder %s26, 1
        %s385 = scalar_select %p384, %s26, 1
        %s386 = smul.addr %s385, 4
        %s387 = smul.addr %s386, 8
        %s388 = scalar_lea.vmem %s1, %s387
        %p389 = pneg %p73
        %p390 = pneg %p70
        %p391 = pneg %p94
        %p392 = pneg %p91
        %p393 = pneg %p115
        %p394 = pneg %p112
        %p395 = pneg %p136
        %p396 = pneg %p133
        %p397 = pneg %p157
        %p398 = pneg %p154
        %p399 = pneg %p178
        %p400 = pneg %p175
        %p401 = pneg %p199
        %p402 = pneg %p196
        %p403 = pneg %p220
        %p404 = pneg %p217
        %p405 = pneg %p241
        %p406 = pneg %p238
        %p407 = pneg %p262
        %p408 = pneg %p259
        %p409 = pneg %p283
        %p410 = pneg %p280
        %p411 = pneg %p309
        %p412 = pneg %p306
        %s413 = sand.u32 %s296, 1
        %s414 = scalar_lea.sflag [#allocation3], %s413
        %s415 = sand.u32 %s296, 1
        %s416 = smul.addr %s415, 32
        %s417 = scalar_lea.vmem [#allocation2], %s416
        %p418 = scmp.lt.s32.totalorder %s26, 1
        %s419 = scalar_select %p418, %s26, 1
        %s420 = scalar_lea.vmem %s0, %s419
        %p421 = scmp.lt.s32.totalorder %s26, 1
        %s422 = scalar_select %p421, %s26, 1
        %s423 = smul.addr %s422, 4
        %s424 = smul.addr %s423, 8
        %s425 = scalar_lea.vmem %s1, %s424
        %v427 = vld [vmem:[%s425] sm:$0xff]
        %v428 = vld [vmem:[%s425 + $0x8] sm:$0xff]
        %v429 = vld [vmem:[%s425 + $0x10] sm:$0xff]
        %v430 = vld [vmem:[%s425 + $0x18] sm:$0xff]
        %v431 = vpack.c.bf16 %v428, %v427
        %v432 = vpack.c.bf16 %v430, %v429
        %v433 = vld [vmem:[%s420] sm:$0x1]
        %v434 = vld [vmem:[%s4] sm:$0xf]
        %v435 = vld [vmem:[%s4 + $0x4] sm:$0xf]
        %v436 = vld [vmem:[%s4 + $0x8] sm:$0xf]
        %v437 = vld [vmem:[%s4 + $0xc] sm:$0xf]
        %v438 = vld [vmem:[%s4 + $0x10] sm:$0xf]
        %v439 = vld [vmem:[%s4 + $0x14] sm:$0xf]
        %v440 = vld [vmem:[%s4 + $0x18] sm:$0xf]
        %v441 = vld [vmem:[%s4 + $0x1c] sm:$0xf]
        %v442 = vld [vmem:[%s5] sm:$0xff]
        %v443 = vld [vmem:[%s5 + $0x8] sm:$0xff]
        %v444 = vld [vmem:[%s5 + $0x10] sm:$0xff]
        %v445 = vld [vmem:[%s5 + $0x18] sm:$0xff]
        %v446 = vld [vmem:[%s5 + $0x20] sm:$0xff]
        %v447 = vld [vmem:[%s5 + $0x28] sm:$0xff]
        %v448 = vld [vmem:[%s5 + $0x30] sm:$0xff]
        %v449 = vld [vmem:[%s5 + $0x38] sm:$0xff]
        %451 = vset.pattern.permute.xlu0 0
        %452 = vperm.xlu0 %451, %v442
        %v453 = vpop.permute.xlu0 %452
        %456 = vset.pattern.permute.xlu0 0
        %457 = vperm.xlu0 %456, %v443
        %v458 = vpop.permute.xlu0 %457
        %461 = vset.pattern.permute.xlu0 0
        %462 = vperm.xlu0 %461, %v444
        %v463 = vpop.permute.xlu0 %462
        %466 = vset.pattern.permute.xlu0 0
        %467 = vperm.xlu0 %466, %v445
        %v468 = vpop.permute.xlu0 %467
        %471 = vset.pattern.permute.xlu0 0
        %472 = vperm.xlu0 %471, %v446
        %v473 = vpop.permute.xlu0 %472
        %476 = vset.pattern.permute.xlu0 0
        %477 = vperm.xlu0 %476, %v447
        %v478 = vpop.permute.xlu0 %477
        %481 = vset.pattern.permute.xlu0 0
        %482 = vperm.xlu0 %481, %v448
        %v483 = vpop.permute.xlu0 %482
        %486 = vset.pattern.permute.xlu0 0
        %487 = vperm.xlu0 %486, %v449
        %v488 = vpop.permute.xlu0 %487
        %v498 = vunpack.c.l.b16 %v434
        %v499 = vunpack.c.l.b16 %v435
        %v500 = vunpack.c.l.b16 %v436
        %v501 = vunpack.c.l.b16 %v437
        %v502 = vunpack.c.l.b16 %v438
        %v503 = vunpack.c.l.b16 %v439
        %v504 = vunpack.c.l.b16 %v440
        %v505 = vunpack.c.l.b16 %v441
        %v506 = vpack.c.b16 %v499, %v498
        %v507 = vpack.c.b16 %v501, %v500
        %v508 = vpack.c.b16 %v503, %v502
        %v509 = vpack.c.b16 %v505, %v504
        %vm510 = vcmask 261120
        %v512 = vsel %vm510, %v506, 0
        %v515 = vsel %vm510, %v507, 0
        %v518 = vsel %vm510, %v508, 0
        %v521 = vsel %vm510, %v509, 0
        %523 = vmatprep.subr.bf16.mxu0 0
        %524 = vmatpush1.bf16.msra.mxu0 %v431
        %525 = vmatprep.subr.bf16.mxu0 0
        %526 = vmatpush1.bf16.msra.mxu0 %v432
        %527 = vmatprep.subr.bf16.mxu0 0
        %528 = vmatpush1.bf16.msra.mxu0 0
        %529 = vmatprep.subr.bf16.mxu0 0
        %530 = vmatpush1.bf16.msra.mxu0 0
        %531 = vmatprep.subr.bf16.mxu0 0
        %532 = vmatpush1.bf16.msra.mxu0 0
        %533 = vmatprep.subr.bf16.mxu0 0
        %534 = vmatpush1.bf16.msra.mxu0 0
        %535 = vmatprep.subr.bf16.mxu0 0
        %536 = vmatpush1.bf16.msra.mxu0 0
        %537 = vmatprep.subr.bf16.mxu0 0
        %538 = vmatpush1.bf16.msra.mxu0 0
        %539 = vmatprep.subr.bf16.mxu0 0
        %540 = vmatpush1.bf16.msra.mxu0 0
        %541 = vmatprep.subr.bf16.mxu0 0
        %542 = vmatpush1.bf16.msra.mxu0 0
        %543 = vmatprep.subr.bf16.mxu0 0
        %544 = vmatpush1.bf16.msra.mxu0 0
        %545 = vmatprep.subr.bf16.mxu0 0
        %546 = vmatpush1.bf16.msra.mxu0 0
        %547 = vmatprep.subr.bf16.mxu0 0
        %548 = vmatpush1.bf16.msra.mxu0 0
        %549 = vmatprep.subr.bf16.mxu0 0
        %550 = vmatpush1.bf16.msra.mxu0 0
        %551 = vmatprep.subr.bf16.mxu0 0
        %552 = vmatpush1.bf16.msra.mxu0 0
        %553 = vmatprep.subr.bf16.mxu0 0
        %554 = vmatpush1.bf16.msra.mxu0 0
        %555 = vmatprep.mubr.bf16.mxu0 0
        %556 = vmatmul.mubr.bf16.gmra.mrb[0].mxu0 %v512
        %v557 = vpop.f32.mrb[0].mxu0
        %v558 = vadd.f32 %v453, %v557
        %v559 = vpop.f32.mrb[0].mxu0
        %v560 = vpop.f32.mrb[0].mxu0
        %v561 = vadd.f32 %v458, %v560
        %v562 = vpop.f32.mrb[0].mxu0
        %563 = vmatprep.mubr.bf16.mxu0 0
        %564 = vmatmul.mubr.bf16.gmra.mrb[0].mxu0 %v515
        %v565 = vpop.f32.mrb[0].mxu0
        %v566 = vadd.f32 %v463, %v565
        %v567 = vpop.f32.mrb[0].mxu0
        %v568 = vpop.f32.mrb[0].mxu0
        %v569 = vadd.f32 %v468, %v568
        %v570 = vpop.f32.mrb[0].mxu0
        %571 = vmatprep.mubr.bf16.mxu0 0
        %572 = vmatmul.mubr.bf16.gmra.mrb[0].mxu0 %v518
        %v573 = vpop.f32.mrb[0].mxu0
        %v574 = vadd.f32 %v473, %v573
        %v575 = vpop.f32.mrb[0].mxu0
        %v576 = vpop.f32.mrb[0].mxu0
        %v577 = vadd.f32 %v478, %v576
        %v578 = vpop.f32.mrb[0].mxu0
        %579 = vmatprep.mubr.bf16.mxu0 0
        %580 = vmatmul.mubr.bf16.gmra.mrb[0].mxu0 %v521
        %v581 = vpop.f32.mrb[0].mxu0
        %v582 = vadd.f32 %v483, %v581
        %v583 = vpop.f32.mrb[0].mxu0
        %v584 = vpop.f32.mrb[0].mxu0
        %v585 = vadd.f32 %v488, %v584
        %v586 = vpop.f32.mrb[0].mxu0
        %587 = vdwg.mxu0
        %v589 = vlaneseq
        %v590 = vshrl.u32 %v589, 7
        %v591 = vsub.s32 0, %v590
        %v592 = vrot.slane %v433, %v591
        %v594 = vld [vmem:[%s2] sm:$0xff]
        %v595 = vld [vmem:[%s2 + $0x8] sm:$0xff]
        %v596 = vld [vmem:[%s2 + $0x10] sm:$0xff]
        %v597 = vld [vmem:[%s2 + $0x18] sm:$0xff]
        %v598 = vmul.f32 %v594, %v592
        %v599 = vmul.f32 %v595, %v592
        %v600 = vmul.f32 %v596, %v592
        %v601 = vmul.f32 %v597, %v592
        %v602 = vsel %vm510, %v598, 0.0
        %603 = vadd.xlane.f32.xlu0 %v602
        %v604 = vpop.xlane.xlu0 %603
        %v605 = vsel %vm510, %v599, 0.0
        %606 = vadd.xlane.f32.xlu0 %v605
        %v607 = vpop.xlane.xlu0 %606
        %v608 = vsel %vm510, %v600, 0.0
        %609 = vadd.xlane.f32.xlu0 %v608
        %v610 = vpop.xlane.xlu0 %609
        %v611 = vsel %vm510, %v601, 0.0
        %612 = vadd.xlane.f32.xlu0 %v611
        %v613 = vpop.xlane.xlu0 %612
        %v614 = vld [vmem:[%s3] sm:$0xff]
        %v615 = vld [vmem:[%s3 + $0x8] sm:$0xff]
        %v616 = vld [vmem:[%s3 + $0x10] sm:$0xff]
        %v617 = vld [vmem:[%s3 + $0x18] sm:$0xff]
        %v618 = vadd.f32 %v604, %v614
        %v619 = vadd.f32 %v607, %v615
        %v620 = vadd.f32 %v610, %v616
        %v621 = vadd.f32 %v613, %v617
        %v622 = vmul.f32 %v618, 0.35355338
        %v623 = vmul.f32 %v619, 0.35355338
        %v624 = vmul.f32 %v620, 0.35355338
        %v625 = vmul.f32 %v621, 0.35355338
        %627 = vset.pattern.permute.xlu0 0
        %628 = vperm.xlu0 %627, %v622
        %v629 = vpop.permute.xlu0 %628
        %632 = vset.pattern.permute.xlu0 0
        %633 = vperm.xlu0 %632, %v623
        %v634 = vpop.permute.xlu0 %633
        %637 = vset.pattern.permute.xlu0 0
        %638 = vperm.xlu0 %637, %v624
        %v639 = vpop.permute.xlu0 %638
        %642 = vset.pattern.permute.xlu0 0
        %643 = vperm.xlu0 %642, %v625
        %v644 = vpop.permute.xlu0 %643
        %v646 = vmul.f32 %v629, %v558
        %v647 = vmul.f32 %v634, %v561
        %v648 = vmul.f32 %v639, %v566
        %v649 = vmul.f32 %v644, %v569
        %v650 = vrot.slane %v646, 4
        %v651 = vadd.f32 %v646, %v650
        %v652 = vrot.slane %v651, 2
        %v653 = vadd.f32 %v651, %v652
        %v654 = vrot.slane %v653, 1
        %v655 = vadd.f32 %v653, %v654
        %v656 = vrot.slane %v647, 4
        %v657 = vadd.f32 %v647, %v656
        %v658 = vrot.slane %v657, 2
        %v659 = vadd.f32 %v657, %v658
        %v660 = vrot.slane %v659, 1
        %v661 = vadd.f32 %v659, %v660
        %v662 = vrot.slane %v648, 4
        %v663 = vadd.f32 %v648, %v662
        %v664 = vrot.slane %v663, 2
        %v665 = vadd.f32 %v663, %v664
        %v666 = vrot.slane %v665, 1
        %v667 = vadd.f32 %v665, %v666
        %v668 = vrot.slane %v649, 4
        %v669 = vadd.f32 %v649, %v668
        %v670 = vrot.slane %v669, 2
        %v671 = vadd.f32 %v669, %v670
        %v672 = vrot.slane %v671, 1
        %v673 = vadd.f32 %v671, %v672
        %vm674 = vcmask 1040384
        %v675 = vsel %vm674, %v655, %v661
        %vm676 = vcmask 1041408
        %v677 = vsel %vm676, %v675, %v667
        %vm678 = vcmask 1042432
        %v679 = vsel %vm678, %v677, %v673
        %vm680 = vcmask 1043456
        %v681 = vsel %vm680, %v679, -inf
        %682 = vmax.xlane.f32.xlu0 %v681
        %v683 = vpop.xlane.xlu0 %682
        %v684 = vsub.f32 %v679, %v683
        %v685 = vmul.f32 %v684, 1.442695
        %v686 = vpow.pop %v685
        %v687 = vsel %vm680, %v686, 0.0
        %688 = vadd.xlane.f32.xlu0 %v687
        %v689 = vpop.xlane.xlu0 %688
        %v690 = vrcp.pop %v689
        %v691 = vmul.f32 %v686, %v690
        %v692 = vlaneseq
        %v693 = vshrl.u32 %v692, 7
        %v694 = vsub.s32 0, %v693
        %v695 = vrot.slane %v691, %v694
        %v696 = vlaneseq
        %v697 = vshrl.u32 %v696, 7
        %v698 = vsub.s32 1, %v697
        %v699 = vrot.slane %v691, %v698
        %v700 = vlaneseq
        %v701 = vshrl.u32 %v700, 7
        %v702 = vsub.s32 2, %v701
        %v703 = vrot.slane %v691, %v702
        %v704 = vlaneseq
        %v705 = vshrl.u32 %v704, 7
        %v706 = vsub.s32 3, %v705
        %v707 = vrot.slane %v691, %v706
        %v708 = vmul.f32 %v574, %v695
        %v709 = vmul.f32 %v577, %v699
        %v710 = vmul.f32 %v582, %v703
        %v711 = vmul.f32 %v585, %v707
        %712 = vadd.xlane.f32.xlu0 %v708
        %v713 = vpop.xlane.xlu0 %712
        %714 = vadd.xlane.f32.xlu0 %v709
        %v715 = vpop.xlane.xlu0 %714
        %716 = vadd.xlane.f32.xlu0 %v710
        %v717 = vpop.xlane.xlu0 %716
        %718 = vadd.xlane.f32.xlu0 %v711
        %v719 = vpop.xlane.xlu0 %718
        %v720 = vld [vmem:[%s6] sm:$0xff]
        %v721 = vld [vmem:[%s6 + $0x8] sm:$0xff]
        %v722 = vld [vmem:[%s6 + $0x10] sm:$0xff]
        %v723 = vld [vmem:[%s6 + $0x18] sm:$0xff]
        %v724 = vmul.f32 %v720, %v713
        %v725 = vmul.f32 %v721, %v715
        %v726 = vmul.f32 %v722, %v717
        %v727 = vmul.f32 %v723, %v719
        %v728 = vsel %vm510, %v724, 0.0
        %v729 = vsel %vm510, %v725, 0.0
        %v730 = vadd.f32 %v728, %v729
        %v731 = vsel %vm510, %v726, 0.0
        %v732 = vadd.f32 %v730, %v731
        %v733 = vsel %vm510, %v727, 0.0
        %v734 = vadd.f32 %v732, %v733
        %v735 = vrot.slane %v734, 4
        %v736 = vadd.f32 %v734, %v735
        %v737 = vrot.slane %v736, 2
        %v738 = vadd.f32 %v736, %v737
        %v739 = vrot.slane %v738, 1
        %v740 = vadd.f32 %v738, %v739
        %v741 = vld [vmem:[%s7] sm:$0x1]
        %v742 = vadd.f32 %v740, %v741
        %v743 = vld [vmem:[%s8] sm:$0x1]
        %v744 = vmul.f32 %v743, %v742
        %v745 = vadd.f32 %v433, %v744
        %v747 = vlaneseq
        %v748 = vshrl.u32 %v747, 7
        %v749 = vsub.s32 0, %v748
        %v750 = vrot.slane %v745, %v749
        %v752 = vld [vmem:[%s10] sm:$0xff]
        %v753 = vld [vmem:[%s10 + $0x8] sm:$0xff]
        %v754 = vld [vmem:[%s10 + $0x10] sm:$0xff]
        %v755 = vld [vmem:[%s10 + $0x18] sm:$0xff]
        %v756 = vmul.f32 %v752, %v750
        %v757 = vmul.f32 %v753, %v750
        %v758 = vmul.f32 %v754, %v750
        %v759 = vmul.f32 %v755, %v750
        %v760 = vsel %vm510, %v756, 0.0
        %761 = vadd.xlane.f32.xlu0 %v760
        %v762 = vpop.xlane.xlu0 %761
        %v763 = vsel %vm510, %v757, 0.0
        %764 = vadd.xlane.f32.xlu0 %v763
        %v765 = vpop.xlane.xlu0 %764
        %v766 = vsel %vm510, %v758, 0.0
        %767 = vadd.xlane.f32.xlu0 %v766
        %v768 = vpop.xlane.xlu0 %767
        %v769 = vsel %vm510, %v759, 0.0
        %770 = vadd.xlane.f32.xlu0 %v769
        %v771 = vpop.xlane.xlu0 %770
        %v772 = vld [vmem:[%s11] sm:$0xff]
        %v773 = vld [vmem:[%s11 + $0x8] sm:$0xff]
        %v774 = vld [vmem:[%s11 + $0x10] sm:$0xff]
        %v775 = vld [vmem:[%s11 + $0x18] sm:$0xff]
        %v776 = vadd.f32 %v762, %v772
        %v777 = vadd.f32 %v765, %v773
        %v778 = vadd.f32 %v768, %v774
        %v779 = vadd.f32 %v771, %v775
        %v780 = vld [vmem:[%s9] sm:$0xf]
        %v781 = vld [vmem:[%s9 + $0x4] sm:$0xf]
        %v782 = vld [vmem:[%s9 + $0x8] sm:$0xf]
        %v783 = vld [vmem:[%s9 + $0xc] sm:$0xf]
        %785 = vset.pattern.permute.xlu0 0
        %786 = vperm.xlu0 %785, %v776
        %v787 = vpop.permute.xlu0 %786
        %790 = vset.pattern.permute.xlu0 0
        %791 = vperm.xlu0 %790, %v777
        %v792 = vpop.permute.xlu0 %791
        %795 = vset.pattern.permute.xlu0 0
        %796 = vperm.xlu0 %795, %v778
        %v797 = vpop.permute.xlu0 %796
        %800 = vset.pattern.permute.xlu0 0
        %801 = vperm.xlu0 %800, %v779
        %v802 = vpop.permute.xlu0 %801
        %v808 = vunpack.c.l.b16 %v780
        %v809 = vunpack.c.l.b16 %v781
        %v810 = vunpack.c.l.b16 %v782
        %v811 = vunpack.c.l.b16 %v783
        %v812 = vpack.c.b16 %v809, %v808
        %v813 = vpack.c.b16 %v811, %v810
        %v815 = vsel %vm510, %v812, 0
        %v818 = vsel %vm510, %v813, 0
        %820 = vmatprep.subr.bf16.mxu0 0
        %821 = vmatpush1.bf16.msra.mxu0 %v431
        %822 = vmatprep.subr.bf16.mxu0 0
        %823 = vmatpush1.bf16.msra.mxu0 %v432
        %824 = vmatprep.subr.bf16.mxu0 0
        %825 = vmatpush1.bf16.msra.mxu0 0
        %826 = vmatprep.subr.bf16.mxu0 0
        %827 = vmatpush1.bf16.msra.mxu0 0
        %828 = vmatprep.subr.bf16.mxu0 0
        %829 = vmatpush1.bf16.msra.mxu0 0
        %830 = vmatprep.subr.bf16.mxu0 0
        %831 = vmatpush1.bf16.msra.mxu0 0
        %832 = vmatprep.subr.bf16.mxu0 0
        %833 = vmatpush1.bf16.msra.mxu0 0
        %834 = vmatprep.subr.bf16.mxu0 0
        %835 = vmatpush1.bf16.msra.mxu0 0
        %836 = vmatprep.subr.bf16.mxu0 0
        %837 = vmatpush1.bf16.msra.mxu0 0
        %838 = vmatprep.subr.bf16.mxu0 0
        %839 = vmatpush1.bf16.msra.mxu0 0
        %840 = vmatprep.subr.bf16.mxu0 0
        %841 = vmatpush1.bf16.msra.mxu0 0
        %842 = vmatprep.subr.bf16.mxu0 0
        %843 = vmatpush1.bf16.msra.mxu0 0
        %844 = vmatprep.subr.bf16.mxu0 0
        %845 = vmatpush1.bf16.msra.mxu0 0
        %846 = vmatprep.subr.bf16.mxu0 0
        %847 = vmatpush1.bf16.msra.mxu0 0
        %848 = vmatprep.subr.bf16.mxu0 0
        %849 = vmatpush1.bf16.msra.mxu0 0
        %850 = vmatprep.subr.bf16.mxu0 0
        %851 = vmatpush1.bf16.msra.mxu0 0
        %852 = vmatprep.mubr.bf16.mxu0 0
        %853 = vmatmul.mubr.bf16.gmra.mrb[0].mxu0 %v815
        %v854 = vpop.f32.mrb[0].mxu0
        %v855 = vadd.f32 %v787, %v854
        %v856 = vpop.f32.mrb[0].mxu0
        %v857 = vpop.f32.mrb[0].mxu0
        %v858 = vadd.f32 %v792, %v857
        %v859 = vpop.f32.mrb[0].mxu0
        %860 = vmatprep.mubr.bf16.mxu0 0
        %861 = vmatmul.mubr.bf16.gmra.mrb[0].mxu0 %v818
        %v862 = vpop.f32.mrb[0].mxu0
        %v863 = vadd.f32 %v797, %v862
        %v864 = vpop.f32.mrb[0].mxu0
        %v865 = vpop.f32.mrb[0].mxu0
        %v866 = vadd.f32 %v802, %v865
        %v867 = vpop.f32.mrb[0].mxu0
        %868 = vdwg.mxu0
        %869 = vst [vmem:[%s417] sm:$0xff] %v855
        %870 = vst [vmem:[%s417 + $0x8] sm:$0xff] %v858
        %871 = vst [vmem:[%s417 + $0x10] sm:$0xff] %v863
        %872 = vst [vmem:[%s417 + $0x18] sm:$0xff] %v866
        %s873 = sand.u32 %s296, 1
        %s874 = scalar_lea.sflag [#allocation3], %s873
        %s875 = sand.u32 %s296, 1
        %s876 = smul.addr %s875, 32
        %s877 = scalar_lea.vmem [#allocation2], %s876
        // Predicated region
        $region69: #{tpu_custom_call.1} parent=67 // pred_check
          %p878 = pneg %p306
        $region70: #{tpu_custom_call.1} parent=67 // pred_check_branch
          %880 = sbr.rel (%p878) target = $region72
        $region71: #{tpu_custom_call.1} parent=67 // pred_region
          %s882 = ssub.s32 512, 512
          %883 = vsyncadd %s874, %s882
          %s884 = smul.addr %s26, 4
          %s885 = smul.addr %s884, 128
          %s886 = scalar_lea.hbm %s12, %s885
          %s887 = sshll.u32 %s877, 4
          %s888 = int_to_ptr.vmem [resolvable:$true] %s887
          %893 = dma.vmem_to_hbm [thread:$0]  %s888, 512, %s886, %s874, 128, 128, 8
        $region72: #{tpu_custom_call.1} parent=67 // pred_fallthru
          _
      $region68: #{tpu_custom_call.1} parent=5 // pred_fallthru
        _
      %p894 = scmp.le.s32.totalorder 2, %s21
      // Predicated region
      $region73: #{tpu_custom_call.1} parent=5 // pred_check
        %p895 = pneg %p894
      $region74: #{tpu_custom_call.1} parent=5 // pred_check_branch
        %897 = sbr.rel (%p895) target = $region76
      $region75: #{tpu_custom_call.1} parent=5 // pred_region
        %s898 = ssub.s32 %s21, 2
        // Predicated region
        $region77: #{tpu_custom_call.1} parent=75 // pred_check
          %p899 = pneg %p312
        $region78: #{tpu_custom_call.1} parent=75 // pred_check_branch
          %901 = sbr.rel (%p899) target = $region80
        $region79: #{tpu_custom_call.1} parent=75 // pred_region
          %s902 = sand.u32 %s297, 1
          %s903 = scalar_lea.sflag [#allocation3], %s902
          %s904 = sand.u32 %s297, 1
          %s905 = smul.addr %s904, 32
          %s906 = scalar_lea.vmem [#allocation2], %s905
          %907 = dma.done %s903, 512
        $region80: #{tpu_custom_call.1} parent=75 // pred_fallthru
          _
      $region76: #{tpu_custom_call.1} parent=5 // pred_fallthru
        _
    $region6: #{tpu_custom_call.1} parent=1 // loop_footer
      %s25 = sadd.s32 1, %s21
    $region7: #{tpu_custom_call.1} parent=1 // loop_footer_branch
      %20 = sbr.rel target = $region3
    $region8: #{tpu_custom_call.1} parent=1 // loop_exit
      _
    %908 = vsyncpa [#allocation3], 1
    %s909 = scalar_lea.sflag [#allocation3], 1
    %910 = vsyncpa %s909, 1

</llo_original>
